<compile_context>
chip_gen: v5e
topology: v5e:2x2
jax: 0.10.0
libtpu: 0.0.40
codegen_flags: <defaults>
</compile_context>

<pallas_src>
import functools

import jax
import jax.numpy as jnp
from jax.experimental import pallas as pl
from jax.experimental.pallas import tpu as pltpu


# ----------------------------------------------------------------------------
# Pallas kernel 1: sigmoid focal loss + cardinality, grid = (L, B, Q-tiles)
# ----------------------------------------------------------------------------
def _cls_card_kernel(logits_ref, tgt_ref, focal_ref, card_ref, *, alpha, gamma):
    qi = pl.program_id(2)

    x = logits_ref[...][0, 0].astype(jnp.float32)      # (TQ, C)
    tgt = tgt_ref[...][0, 0]                           # (TQ, 1) int32
    tq, c = x.shape

    # One-hot built in-register: target id == num_classes ("no object") matches no
    # column -> all-zero row, identical to one_hot(..., C+1)[..., :-1] in the reference.
    col = jax.lax.broadcasted_iota(jnp.int32, (tq, c), 1)
    t = (col == tgt).astype(jnp.float32)

    # --- sigmoid focal loss, minimal EUP work ---
    e = jnp.exp(-jnp.abs(x))                           # exp(-|x|) in (0, 1]
    r = pl.reciprocal(1.0 + e, approx=True)            # 1 / (1 + e)  (EUP vrcp)
    p = jnp.where(x >= 0.0, r, e * r)                  # sigmoid(x)
    ce = jnp.maximum(x, 0.0) - x * t + jnp.log(1.0 + e)  # stable BCE-with-logits
    p_t = p * t + (1.0 - p) * (1.0 - t)
    one_minus_pt = 1.0 - p_t
    if gamma == 2.0:
        mod = one_minus_pt * one_minus_pt
    else:
        mod = jnp.power(one_minus_pt, gamma)
    alpha_t = alpha * t + (1.0 - alpha) * (1.0 - t)
    focal_partial = jnp.sum(alpha_t * mod * ce)

    # --- cardinality: #(argmax over classes != C-1), iota-masked (no lane slice) ---
    is_last = col == (c - 1)
    last = jnp.sum(jnp.where(is_last, x, 0.0), axis=-1, keepdims=True)          # (TQ,1)
    rest_max = jnp.max(jnp.where(is_last, -jnp.inf, x), axis=-1, keepdims=True)  # (TQ,1)
    card_partial = jnp.sum((rest_max >= last).astype(jnp.float32))

    @pl.when(qi == 0)
    def _():
        focal_ref[...] = jnp.zeros_like(focal_ref)
        card_ref[...] = jnp.zeros_like(card_ref)

    focal_ref[...] += focal_partial
    card_ref[...] += card_partial


def _pick_q_tile(q):
    # Largest power-of-two tile <= 512 that divides Q (keeps VMEM bounded on v7x's
    # 64 MiB while amortizing per-step overhead on v5e/v6e); fall back to full Q.
    for cand in (512, 256, 128, 64, 32, 16, 8):
        if q % cand == 0:
            return cand
    return q


def classification_and_cardinality(logits_all, target_classes, alpha, gamma):
    """logits_all: (L,B,Q,C); target_classes: (L,B,Q) int32 (value==num_classes => no-object).

    Returns (focal_sum, card_pred), each (L, B): per-layer/per-image focal-loss sums and
    predicted non-empty-box counts.
    """
    L, B, Q, C = logits_all.shape
    tq = _pick_q_tile(Q)
    nq = Q // tq
    tgt4 = target_classes.reshape(L, B, Q, 1).astype(jnp.int32)
    kernel = functools.partial(_cls_card_kernel, alpha=float(alpha), gamma=float(gamma))
    focal, card = pl.pallas_call(
        kernel,
        out_shape=(jax.ShapeDtypeStruct((L, B, 1, 1), jnp.float32),
                   jax.ShapeDtypeStruct((L, B, 1, 1), jnp.float32)),
        grid=(L, B, nq),
        in_specs=[pl.BlockSpec((1, 1, tq, C), lambda l, b, q: (l, b, q, 0)),
                  pl.BlockSpec((1, 1, tq, 1), lambda l, b, q: (l, b, q, 0))],
        out_specs=(pl.BlockSpec((1, 1, 1, 1), lambda l, b, q: (l, b, 0, 0)),
                   pl.BlockSpec((1, 1, 1, 1), lambda l, b, q: (l, b, 0, 0))),
        compiler_params=pltpu.CompilerParams(
            dimension_semantics=("parallel", "parallel", "arbitrary")),
    )(logits_all, tgt4)
    return focal[:, :, 0, 0], card[:, :, 0, 0]


# ----------------------------------------------------------------------------
# Pallas kernel 2: box losses for ALL layers in one launch, lane-dense (L, 4, N)
# ----------------------------------------------------------------------------
def _box_loss_kernel(src_ref, tgt_ref, l1_ref, giou_ref):
    s = src_ref[...].astype(jnp.float32)     # (L, 4, N) cxcywh, matched pairs in lanes
    t = tgt_ref[...].astype(jnp.float32)
    eps = 1e-7                               # guards degenerate/zero-area pairs

    l1 = jnp.sum(jnp.abs(s - t), axis=1)                 # (L, N)
    l1_ref[...] = jnp.sum(l1, axis=1, keepdims=True)     # (L, 1)

    def to_xyxy(b):
        cx, cy, w, h = b[:, 0, :], b[:, 1, :], b[:, 2, :], b[:, 3, :]
        return cx - 0.5 * w, cy - 0.5 * h, cx + 0.5 * w, cy + 0.5 * h

    sx0, sy0, sx1, sy1 = to_xyxy(s)
    tx0, ty0, tx1, ty1 = to_xyxy(t)
    area_s = (sx1 - sx0) * (sy1 - sy0)
    area_t = (tx1 - tx0) * (ty1 - ty0)
    iw = jnp.maximum(jnp.minimum(sx1, tx1) - jnp.maximum(sx0, tx0), 0.0)
    ih = jnp.maximum(jnp.minimum(sy1, ty1) - jnp.maximum(sy0, ty0), 0.0)
    inter = iw * ih
    union = area_s + area_t - inter
    iou = inter / (union + eps)
    cw = jnp.maximum(sx1, tx1) - jnp.minimum(sx0, tx0)
    ch = jnp.maximum(sy1, ty1) - jnp.minimum(sy0, ty0)
    area_c = cw * ch
    giou = iou - (area_c - union) / (area_c + eps)
    giou_ref[...] = jnp.sum(1.0 - giou, axis=1, keepdims=True)   # (L, 1)


def box_losses(src_boxes_all, tgt_boxes_all):
    """src/tgt: (L, N, 4) matched cxcywh pairs. Returns per-layer (L1 sum, 1-GIoU sum), each (L,)."""
    L = src_boxes_all.shape[0]
    s = jnp.transpose(src_boxes_all, (0, 2, 1))   # (L, 4, N): pairs on the lane axis
    t = jnp.transpose(tgt_boxes_all, (0, 2, 1))
    l1, giou = pl.pallas_call(
        _box_loss_kernel,
        out_shape=(jax.ShapeDtypeStruct((L, 1), jnp.float32),
                   jax.ShapeDtypeStruct((L, 1), jnp.float32)),
        in_specs=[pl.BlockSpec(memory_space=pltpu.MemorySpace.VMEM),
                  pl.BlockSpec(memory_space=pltpu.MemorySpace.VMEM)],
        out_specs=(pl.BlockSpec(memory_space=pltpu.MemorySpace.VMEM),
                   pl.BlockSpec(memory_space=pltpu.MemorySpace.VMEM)),
    )(s, t)
    return l1[:, 0], giou[:, 0]


# ----------------------------------------------------------------------------
# Plain-JAX glue: box utilities + (approximate) matcher, vmapped over (L, B)
# ----------------------------------------------------------------------------
def _cxcywh_to_xyxy(b):
    cx, cy, w, h = jnp.split(b, 4, axis=-1)
    return jnp.concatenate([cx - 0.5 * w, cy - 0.5 * h, cx + 0.5 * w, cy + 0.5 * h], -1)


def _pairwise_giou(a, b):
    # a: (Q, 4) xyxy, b: (T, 4) xyxy -> (Q, T)
    area_a = (a[:, 2] - a[:, 0]) * (a[:, 3] - a[:, 1])
    area_b = (b[:, 2] - b[:, 0]) * (b[:, 3] - b[:, 1])
    lt = jnp.maximum(a[:, None, :2], b[None, :, :2])
    rb = jnp.minimum(a[:, None, 2:], b[None, :, 2:])
    wh = jnp.clip(rb - lt, 0.0)
    inter = wh[..., 0] * wh[..., 1]
    union = area_a[:, None] + area_b[None, :] - inter
    iou = inter / (union + 1e-7)
    lt2 = jnp.minimum(a[:, None, :2], b[None, :, :2])
    rb2 = jnp.maximum(a[:, None, 2:], b[None, :, 2:])
    wh2 = jnp.clip(rb2 - lt2, 0.0)
    area_c = wh2[..., 0] * wh2[..., 1]
    return iou - (area_c - union) / (area_c + 1e-7)


def _greedy_matcher(pred_logits, pred_boxes, tgt_labels, tgt_boxes, *, alpha, gamma):
    """Approximate Hungarian matcher for one image / one layer (glue, plain JAX)."""
    # TODO(synk): exact Hungarian assignment (scipy.optimize.linear_sum_assignment) has
    # no Pallas/JAX equivalent; a deterministic greedy assignment is used instead.
    prob = jax.nn.sigmoid(pred_logits)                              # (Q, C)
    neg = (1 - alpha) * (prob ** gamma) * (-jnp.log(1 - prob + 1e-8))
    pos = alpha * ((1 - prob) ** gamma) * (-jnp.log(prob + 1e-8))
    cost_class = pos[:, tgt_labels] - neg[:, tgt_labels]            # (Q, T)
    cost_bbox = jnp.sum(jnp.abs(pred_boxes[:, None, :] - tgt_boxes[None, :, :]), -1)
    cost_giou = -_pairwise_giou(_cxcywh_to_xyxy(pred_boxes), _cxcywh_to_xyxy(tgt_boxes))
    cost = 2.0 * cost_class + 5.0 * cost_bbox + 2.0 * cost_giou     # (Q, T)

    Q, T = cost.shape

    def body(t, carry):
        assigned, src = carry
        c = jnp.where(assigned, jnp.inf, cost[:, t])
        q = jnp.argmin(c).astype(jnp.int32)
        return assigned.at[q].set(True), src.at[t].set(q)

    assigned0 = jnp.zeros((Q,), dtype=bool)
    src0 = jnp.zeros((T,), dtype=jnp.int32)
    _, src = jax.lax.fori_loop(0, T, body, (assigned0, src0))
    return src                                                      # (T,)


# ----------------------------------------------------------------------------
# SetCriterion forward (focal_loss=True path; losses = labels, boxes, cardinality)
# ----------------------------------------------------------------------------
class SetCriterionPallas:
    def __init__(self, num_classes, weight_dict, eos_coef, losses,
                 focal_loss=True, focal_alpha=0.25, focal_gamma=2.0,
                 tracking=True, track_query_false_positive_eos_weight=True):
        self.num_classes = num_classes
        self.weight_dict = weight_dict
        self.eos_coef = eos_coef
        self.losses = losses
        self.focal_loss = focal_loss
        self.focal_alpha = focal_alpha
        self.focal_gamma = focal_gamma
        self.tracking = tracking
        self.track_query_false_positive_eos_weight = track_query_false_positive_eos_weight
        # registered buffer (only used by the non-focal CE path; kept for fidelity)
        self.empty_weight = jnp.ones(num_classes + 1, jnp.float32).at[-1].set(eos_coef)
        # TODO(synk): non-focal weighted cross-entropy path, loss_masks (bilinear
        # interpolate + nested tensors), enc_outputs branch, torch.distributed
        # all_reduce of num_boxes and track-query false-positive EOS reweighting
        # are not implemented.

    def __call__(self, outputs, targets):
        tgt_labels = targets['labels'].astype(jnp.int32)   # (B, T)
        tgt_boxes = targets['boxes']                       # (B, T, 4)
        B, T = tgt_labels.shape
        num_boxes = float(max(B * T, 1))   # clamp(num_boxes / world_size, min=1)

        # Stack main + aux decoder layers -> single pallas_call per loss.
        layers = [outputs] + list(outputs.get('aux_outputs', []))
        logits_all = jnp.stack([lay['pred_logits'] for lay in layers])   # (L, B, Q, C)
        boxes_all = jnp.stack([lay['pred_boxes'] for lay in layers])     # (L, B, Q, 4)
        L, _, Q, C = logits_all.shape

        # 1) matching (glue), vmapped over layers and images
        match_one = functools.partial(_greedy_matcher,
                                      alpha=self.focal_alpha, gamma=self.focal_gamma)
        match_b = jax.vmap(match_one, in_axes=(0, 0, 0, 0))
        match_lb = jax.vmap(match_b, in_axes=(0, 0, None, None))
        src_indices = match_lb(logits_all, boxes_all, tgt_labels, tgt_boxes)  # (L, B, T)

        l_ar = jnp.arange(L)[:, None, None]
        b_ar = jnp.arange(B)[None, :, None]

        # 2) classification targets: int32 ids only (one-hot lives inside the kernel)
        target_classes = jnp.full((L, B, Q), self.num_classes, jnp.int32)
        labels_lbt = jnp.broadcast_to(tgt_labels[None], (L, B, T))
        target_classes = target_classes.at[l_ar, b_ar, src_indices].set(labels_lbt)

        focal_lb, card_lb = classification_and_cardinality(
            logits_all, target_classes, self.focal_alpha, self.focal_gamma)   # (L,B) each
        # sigmoid_focal_loss: loss.mean(1).sum()/num_boxes, then *= Q  ==  sum/num_boxes
        loss_ce = jnp.sum(focal_lb, axis=1) / num_boxes                       # (L,)
        card_err = jnp.mean(jnp.abs(card_lb - float(T)), axis=1)              # (L,)

        # 3) box losses on matched pairs, all layers in one kernel launch
        src_boxes = boxes_all[l_ar, b_ar, src_indices].reshape(L, B * T, 4)
        tgt_boxes_all = jnp.broadcast_to(tgt_boxes.reshape(1, B * T, 4), (L, B * T, 4))
        l1_sum, giou_sum = box_losses(src_boxes, tgt_boxes_all)               # (L,), (L,)
        loss_bbox = l1_sum / num_boxes
        loss_giou = giou_sum / num_boxes

        losses = {'loss_ce': loss_ce[0], 'cardinality_error': card_err[0],
                  'loss_bbox': loss_bbox[0], 'loss_giou': loss_giou[0]}
        # class_error (log=True, main layer only)
        matched_logits = logits_all[0][jnp.arange(B)[:, None], src_indices[0]]  # (B,T,C)
        acc = jnp.mean(
            (jnp.argmax(matched_logits, -1) == tgt_labels).astype(jnp.float32)) * 100.0
        losses['class_error'] = 100.0 - acc

        for i in range(L - 1):
            j = i + 1
            losses[f'loss_ce_{i}'] = loss_ce[j]
            losses[f'cardinality_error_{i}'] = card_err[j]
            losses[f'loss_bbox_{i}'] = loss_bbox[j]
            losses[f'loss_giou_{i}'] = loss_giou[j]
        return losses


# ----------------------------------------------------------------------------
if __name__ == "__main__":
    key = jax.random.PRNGKey(0)
    B, Q, C, T = 2, 16, 8, 3          # batch, queries, classes (no no-object), gt per image
    NUM_AUX = 2

    keys = jax.random.split(key, 4 + 2 * NUM_AUX)
    pred_logits = jax.random.normal(keys[0], (B, Q, C), jnp.float32)
    pred_boxes = jax.nn.sigmoid(jax.random.normal(keys[1], (B, Q, 4), jnp.float32))
    tgt_labels = jax.random.randint(keys[2], (B, T), 0, C).astype(jnp.int32)
    tgt_boxes = jax.nn.sigmoid(jax.random.normal(keys[3], (B, T, 4), jnp.float32))

    aux_outputs = []
    for i in range(NUM_AUX):
        ka, kb = keys[4 + 2 * i], keys[5 + 2 * i]
        aux_outputs.append({
            'pred_logits': jax.random.normal(ka, (B, Q, C), jnp.float32),
            'pred_boxes': jax.nn.sigmoid(jax.random.normal(kb, (B, Q, 4), jnp.float32)),
        })

    outputs = {'pred_logits': pred_logits, 'pred_boxes': pred_boxes,
               'aux_outputs': aux_outputs}
    targets = {'labels': tgt_labels, 'boxes': tgt_boxes}

    weight_dict = {'loss_ce': 2.0, 'loss_bbox': 5.0, 'loss_giou': 2.0}
    aux_weight = {}
    for i in range(NUM_AUX):
        aux_weight.update({f'{k}_{i}': v for k, v in weight_dict.items()})
    weight_dict.update(aux_weight)

    criterion = SetCriterionPallas(
        num_classes=C, weight_dict=weight_dict, eos_coef=0.1,
        losses=['labels', 'boxes', 'cardinality'],
        focal_loss=True, focal_alpha=0.25, focal_gamma=2.0,
        tracking=True, track_query_false_positive_eos_weight=True)

    losses = criterion(outputs, targets)
    jax.block_until_ready(losses)
    print("KERNEL_OK")
</pallas_src>

<mosaic_0001>
module attributes {stable_mosaic.version = 11 : i64} {
  func.func @_cls_card_kernel(%arg0: i32, %arg1: i32, %arg2: i32, %arg3: memref<1x1x16x8xf32, #tpu.memory_space<vmem>>, %arg4: memref<1x1x16x1xi32, #tpu.memory_space<vmem>>, %arg5: memref<1x1x1x1xf32, #tpu.memory_space<vmem>>, %arg6: memref<1x1x1x1xf32, #tpu.memory_space<vmem>>) attributes {dimension_semantics = [#tpu.dimension_semantics<parallel>, #tpu.dimension_semantics<parallel>, #tpu.dimension_semantics<arbitrary>], iteration_bounds = array<i64: 3, 2, 1>, scalar_prefetch = 0 : i64, scratch_operands = 0 : i64, tpu.core_type = #tpu.core_type<tc>, window_params = [{transform_indices = @transform_0, window_bounds = array<i64: 1, 1, 16, 8>}, {transform_indices = @transform_1, window_bounds = array<i64: 1, 1, 16, 1>}, {transform_indices = @transform_2, window_bounds = array<i64: 1, 1, 1, 1>}, {transform_indices = @transform_3, window_bounds = array<i64: 1, 1, 1, 1>}]} {
    %c0 = arith.constant 0 : index
    %c0_0 = arith.constant 0 : index
    %c0_1 = arith.constant 0 : index
    %c0_2 = arith.constant 0 : index
    %0 = vector.load %arg3[%c0, %c0_0, %c0_1, %c0_2] : memref<1x1x16x8xf32, #tpu.memory_space<vmem>>, vector<1x1x16x8xf32>
    %1 = vector.shape_cast %0 : vector<1x1x16x8xf32> to vector<16x8xf32>
    %c0_3 = arith.constant 0 : index
    %c0_4 = arith.constant 0 : index
    %c0_5 = arith.constant 0 : index
    %c0_6 = arith.constant 0 : index
    %2 = vector.load %arg4[%c0_3, %c0_4, %c0_5, %c0_6] : memref<1x1x16x1xi32, #tpu.memory_space<vmem>>, vector<1x1x16x1xi32>
    %3 = vector.shape_cast %2 : vector<1x1x16x1xi32> to vector<16x1xi32>
    %4 = tpu.iota {dimensions = array<i32: 1>} : vector<16x8xi32>
    %5 = vector.broadcast %3 : vector<16x1xi32> to vector<16x8xi32>
    %6 = arith.cmpi eq, %4, %5 : vector<16x8xi32>
    %7 = arith.extui %6 : vector<16x8xi1> to vector<16x8xi32>
    %8 = arith.sitofp %7 : vector<16x8xi32> to vector<16x8xf32>
    %9 = math.absf %1 : vector<16x8xf32>
    %cst = arith.constant 0.000000e+00 : f32
    %10 = vector.broadcast %cst : f32 to vector<16x8xf32>
    %11 = arith.subf %10, %9 : vector<16x8xf32>
    %12 = math.exp %11 : vector<16x8xf32>
    %cst_7 = arith.constant 1.000000e+00 : f32
    %13 = vector.broadcast %cst_7 : f32 to vector<16x8xf32>
    %14 = arith.addf %13, %12 : vector<16x8xf32>
    %15 = tpu.reciprocal %14 {approx = true} : vector<16x8xf32> -> vector<16x8xf32>
    %cst_8 = arith.constant 0.000000e+00 : f32
    %16 = vector.broadcast %cst_8 : f32 to vector<16x8xf32>
    %17 = arith.cmpf oge, %1, %16 : vector<16x8xf32>
    %18 = arith.mulf %12, %15 : vector<16x8xf32>
    %19 = arith.select %17, %15, %18 : vector<16x8xi1>, vector<16x8xf32>
    %cst_9 = arith.constant 0.000000e+00 : f32
    %20 = vector.broadcast %cst_9 : f32 to vector<16x8xf32>
    %21 = arith.maximumf %1, %20 : vector<16x8xf32>
    %22 = arith.mulf %1, %8 : vector<16x8xf32>
    %23 = arith.subf %21, %22 : vector<16x8xf32>
    %cst_10 = arith.constant 1.000000e+00 : f32
    %24 = vector.broadcast %cst_10 : f32 to vector<16x8xf32>
    %25 = arith.addf %24, %12 : vector<16x8xf32>
    %26 = math.log %25 : vector<16x8xf32>
    %27 = arith.addf %23, %26 : vector<16x8xf32>
    %28 = arith.mulf %19, %8 : vector<16x8xf32>
    %cst_11 = arith.constant 1.000000e+00 : f32
    %29 = vector.broadcast %cst_11 : f32 to vector<16x8xf32>
    %30 = arith.subf %29, %19 : vector<16x8xf32>
    %cst_12 = arith.constant 1.000000e+00 : f32
    %31 = vector.broadcast %cst_12 : f32 to vector<16x8xf32>
    %32 = arith.subf %31, %8 : vector<16x8xf32>
    %33 = arith.mulf %30, %32 : vector<16x8xf32>
    %34 = arith.addf %28, %33 : vector<16x8xf32>
    %cst_13 = arith.constant 1.000000e+00 : f32
    %35 = vector.broadcast %cst_13 : f32 to vector<16x8xf32>
    %36 = arith.subf %35, %34 : vector<16x8xf32>
    %37 = arith.mulf %36, %36 : vector<16x8xf32>
    %cst_14 = arith.constant 2.500000e-01 : f32
    %38 = vector.broadcast %cst_14 : f32 to vector<16x8xf32>
    %39 = arith.mulf %38, %8 : vector<16x8xf32>
    %cst_15 = arith.constant 1.000000e+00 : f32
    %40 = vector.broadcast %cst_15 : f32 to vector<16x8xf32>
    %41 = arith.subf %40, %8 : vector<16x8xf32>
    %cst_16 = arith.constant 7.500000e-01 : f32
    %42 = vector.broadcast %cst_16 : f32 to vector<16x8xf32>
    %43 = arith.mulf %42, %41 : vector<16x8xf32>
    %44 = arith.addf %39, %43 : vector<16x8xf32>
    %45 = arith.mulf %44, %37 : vector<16x8xf32>
    %46 = arith.mulf %45, %27 : vector<16x8xf32>
    %47 = vector.shape_cast %46 : vector<16x8xf32> to vector<1x16x8xf32>
    %cst_17 = arith.constant dense<0.000000e+00> : vector<1xf32>
    %48 = vector.multi_reduction <add>, %47, %cst_17 [1, 2] : vector<1x16x8xf32> to vector<1xf32>
    %49 = vector.shape_cast %48 : vector<1xf32> to vector<1x1x1xf32>
    %50 = vector.extract %49[0, 0, 0] : f32 from vector<1x1x1xf32>
    %c7_i32 = arith.constant 7 : i32
    %51 = vector.broadcast %c7_i32 : i32 to vector<16x8xi32>
    %52 = arith.cmpi eq, %4, %51 : vector<16x8xi32>
    %cst_18 = arith.constant 0.000000e+00 : f32
    %53 = vector.broadcast %cst_18 : f32 to vector<16x8xf32>
    %54 = arith.select %52, %1, %53 : vector<16x8xi1>, vector<16x8xf32>
    %cst_19 = arith.constant dense<0.000000e+00> : vector<16xf32>
    %55 = vector.multi_reduction <add>, %54, %cst_19 [1] : vector<16x8xf32> to vector<16xf32>
    %56 = vector.shape_cast %55 : vector<16xf32> to vector<16x1xf32>
    %cst_20 = arith.constant 0xFF800000 : f32
    %57 = vector.broadcast %cst_20 : f32 to vector<16x8xf32>
    %58 = arith.select %52, %57, %1 : vector<16x8xi1>, vector<16x8xf32>
    %cst_21 = arith.constant dense<0xFF800000> : vector<16xf32>
    %59 = vector.multi_reduction <maximumf>, %58, %cst_21 [1] : vector<16x8xf32> to vector<16xf32>
    %60 = vector.shape_cast %59 : vector<16xf32> to vector<16x1xf32>
    %61 = arith.cmpf oge, %60, %56 : vector<16x1xf32>
    %62 = arith.extui %61 : vector<16x1xi1> to vector<16x1xi32>
    %63 = arith.sitofp %62 : vector<16x1xi32> to vector<16x1xf32>
    %64 = vector.shape_cast %63 : vector<16x1xf32> to vector<1x16x1xf32>
    %cst_22 = arith.constant dense<0.000000e+00> : vector<1xf32>
    %65 = vector.multi_reduction <add>, %64, %cst_22 [1, 2] : vector<1x16x1xf32> to vector<1xf32>
    %66 = vector.shape_cast %65 : vector<1xf32> to vector<1x1x1xf32>
    %67 = vector.extract %66[0, 0, 0] : f32 from vector<1x1x1xf32>
    %c0_i32 = arith.constant 0 : i32
    %68 = arith.cmpi eq, %arg2, %c0_i32 : i32
    %69 = arith.extui %68 : i1 to i32
    %c0_i32_23 = arith.constant 0 : i32
    %70 = arith.cmpi ne, %69, %c0_i32_23 : i32
    scf.if %70 {
      %cst_40 = arith.constant 0.000000e+00 : f32
      %79 = vector.broadcast %cst_40 : f32 to vector<1x1x1x1xf32>
      %c0_41 = arith.constant 0 : index
      %c0_42 = arith.constant 0 : index
      %c0_43 = arith.constant 0 : index
      %c0_44 = arith.constant 0 : index
      %80 = vector.load %arg5[%c0_41, %c0_42, %c0_43, %c0_44] : memref<1x1x1x1xf32, #tpu.memory_space<vmem>>, vector<1x1x1x1xf32>
      tpu.vector_store %arg5[%c0_41, %c0_42, %c0_43, %c0_44], %79 {strides = array<i32>} : memref<1x1x1x1xf32, #tpu.memory_space<vmem>>, vector<1x1x1x1xf32>,
      %cst_45 = arith.constant 0.000000e+00 : f32
      %81 = vector.broadcast %cst_45 : f32 to vector<1x1x1x1xf32>
      %c0_46 = arith.constant 0 : index
      %c0_47 = arith.constant 0 : index
      %c0_48 = arith.constant 0 : index
      %c0_49 = arith.constant 0 : index
      %82 = vector.load %arg6[%c0_46, %c0_47, %c0_48, %c0_49] : memref<1x1x1x1xf32, #tpu.memory_space<vmem>>, vector<1x1x1x1xf32>
      tpu.vector_store %arg6[%c0_46, %c0_47, %c0_48, %c0_49], %81 {strides = array<i32>} : memref<1x1x1x1xf32, #tpu.memory_space<vmem>>, vector<1x1x1x1xf32>,
    } else {
    }
    %c0_24 = arith.constant 0 : index
    %c0_25 = arith.constant 0 : index
    %c0_26 = arith.constant 0 : index
    %c0_27 = arith.constant 0 : index
    %71 = vector.load %arg5[%c0_24, %c0_25, %c0_26, %c0_27] : memref<1x1x1x1xf32, #tpu.memory_space<vmem>>, vector<1x1x1x1xf32>
    %72 = vector.broadcast %50 : f32 to vector<1x1x1x1xf32>
    %73 = arith.addf %71, %72 : vector<1x1x1x1xf32>
    %c0_28 = arith.constant 0 : index
    %c0_29 = arith.constant 0 : index
    %c0_30 = arith.constant 0 : index
    %c0_31 = arith.constant 0 : index
    %74 = vector.load %arg5[%c0_28, %c0_29, %c0_30, %c0_31] : memref<1x1x1x1xf32, #tpu.memory_space<vmem>>, vector<1x1x1x1xf32>
    tpu.vector_store %arg5[%c0_28, %c0_29, %c0_30, %c0_31], %73 {strides = array<i32>} : memref<1x1x1x1xf32, #tpu.memory_space<vmem>>, vector<1x1x1x1xf32>,
    %c0_32 = arith.constant 0 : index
    %c0_33 = arith.constant 0 : index
    %c0_34 = arith.constant 0 : index
    %c0_35 = arith.constant 0 : index
    %75 = vector.load %arg6[%c0_32, %c0_33, %c0_34, %c0_35] : memref<1x1x1x1xf32, #tpu.memory_space<vmem>>, vector<1x1x1x1xf32>
    %76 = vector.broadcast %67 : f32 to vector<1x1x1x1xf32>
    %77 = arith.addf %75, %76 : vector<1x1x1x1xf32>
    %c0_36 = arith.constant 0 : index
    %c0_37 = arith.constant 0 : index
    %c0_38 = arith.constant 0 : index
    %c0_39 = arith.constant 0 : index
    %78 = vector.load %arg6[%c0_36, %c0_37, %c0_38, %c0_39] : memref<1x1x1x1xf32, #tpu.memory_space<vmem>>, vector<1x1x1x1xf32>
    tpu.vector_store %arg6[%c0_36, %c0_37, %c0_38, %c0_39], %77 {strides = array<i32>} : memref<1x1x1x1xf32, #tpu.memory_space<vmem>>, vector<1x1x1x1xf32>,
    return
  }
  func.func @transform_0(%arg0: i32, %arg1: i32, %arg2: i32) -> (i32, i32, i32, i32) {
    %c0_i32 = arith.constant 0 : i32
    %c0_i32_0 = arith.constant 0 : i32
    return %arg0, %arg1, %arg2, %c0_i32 : i32, i32, i32, i32
  }
  func.func @transform_1(%arg0: i32, %arg1: i32, %arg2: i32) -> (i32, i32, i32, i32) {
    %c0_i32 = arith.constant 0 : i32
    %c0_i32_0 = arith.constant 0 : i32
    return %arg0, %arg1, %arg2, %c0_i32 : i32, i32, i32, i32
  }
  func.func @transform_2(%arg0: i32, %arg1: i32, %arg2: i32) -> (i32, i32, i32, i32) {
    %c0_i32 = arith.constant 0 : i32
    %c0_i32_0 = arith.constant 0 : i32
    %c0_i32_1 = arith.constant 0 : i32
    return %arg0, %arg1, %c0_i32, %c0_i32_0 : i32, i32, i32, i32
  }
  func.func @transform_3(%arg0: i32, %arg1: i32, %arg2: i32) -> (i32, i32, i32, i32) {
    %c0_i32 = arith.constant 0 : i32
    %c0_i32_0 = arith.constant 0 : i32
    %c0_i32_1 = arith.constant 0 : i32
    return %arg0, %arg1, %c0_i32, %c0_i32_0 : i32, i32, i32, i32
  }
}

</mosaic_0001>

<llo_original>
// kernel: tpu_custom_call.1
$region0: #{tpu_custom_call.1}
  #allocation0 [shape = 'u32[]', space=smem, size = 0x4, offset = 0x4, fixed_abs, tag = 'smem constant byte address 0x4 - core index']
  #allocation1 [shape = 'u32[72,128]{1,0:T(1,128)}', space=vmem, size = 0x9000, scoped, tag = 'internal scratch']
  %s0 = inlined_call_operand.vmem [shape: f32[3,2,16,8], index: 0, kind: input, shape index: {}]
  %s1 = inlined_call_operand.vmem [shape: s32[3,2,16,1], index: 1, kind: input, shape index: {}]
  %s2 = inlined_call_operand.vmem [shape: f32[3,2,1,1], index: 2, kind: output, shape index: {0}]
  %s3 = inlined_call_operand.vmem [shape: f32[3,2,1,1], index: 3, kind: output, shape index: {1}]
  %4 = xla_tuple %s2, %s3
  %s5 = sld [smem:[#allocation0]]
  $region53: #{tpu_custom_call.1} parent=0
    _
  %s7 = ssub.s32 1, %s5
  %s8 = scalar_select 0, %s7, %s5
  loop: start=0, step=1, limit=8
  $region2: #{tpu_custom_call.1} parent=0 // loop_pre_header
    _
  $region3: #{tpu_custom_call.1} parent=0 // loop_header
    %s10 = sphi 0, %s14
    %p11 = scmp.ge.s32.totalorder %s10, 8
    %s17 = sphi 0, %s36
    %s18 = sphi 0, %s32
    %s19 = sphi 0, %s28
    %s20 = sphi 0, %s17
    %s21 = sphi 0, %s18
    %s22 = sphi 0, %s19
    %s23 = sphi 0, %s20
    %s24 = sphi 0, %s21
    %s25 = sphi 0, %s22
    %s43 = sphi 0, %s45
    %s46 = sphi 0, %s43
    %s47 = sphi 0, %s46
    %s63 = sphi 0, %s47
    %s73 = sphi 0, %s75
    %s76 = sphi 0, %s73
    %s77 = sphi 0, %s76
    %s93 = sphi 0, %s77
    %s101 = sphi 0, %s103
    %s104 = sphi 0, %s101
    %s105 = sphi 0, %s104
    %s121 = sphi 0, %s105
    %s129 = sphi 0, %s131
    %s132 = sphi 0, %s129
    %s133 = sphi 0, %s132
    %s149 = sphi 0, %s133
  $region4: #{tpu_custom_call.1} parent=0 // loop_header_branch
    %13 = sbr.rel (%p11) target = $region8
  $region5: #{tpu_custom_call.1} parent=0 // loop_body
    %s15 = ssub.s32 %s10, 1
    %s16 = ssub.s32 %s10, 2
    %s26 = sadd.s32 1, %s19
    %p27 = scmp.ge.s32.totalorder %s26, 1
    %s28 = scalar_select %p27, 0, %s26
    %s29 = sadd.s32 1, %s18
    %s30 = scalar_select %p27, %s29, %s18
    %p31 = scmp.ge.s32.totalorder %s30, 2
    %s32 = scalar_select %p31, 0, %s30
    %s33 = sadd.s32 1, %s17
    %s34 = scalar_select %p31, %s33, %s17
    %p35 = scmp.ge.s32.totalorder %s34, 3
    %s36 = scalar_select %p35, 0, %s34
    %s37 = ssub.s32 %s17, %s36
    %s38 = ssub.s32 %s18, %s32
    %s39 = sor.u32 %s37, %s38
    %s40 = ssub.s32 %s19, %s28
    %s41 = sor.u32 %s39, %s40
    %p42 = scmp.eq.s32.totalorder %s41, 0
    %s44 = sadd.s32 %s43, 1
    %s45 = scalar_select %p42, %s43, %s44
    %p48 = pneg %p42
    %p49 = scmp.eq.s32.totalorder %s10, 5
    %p50 = por %p48, %p49
    %p51 = scmp.ne.s32.totalorder %s43, %s46
    %p52 = scmp.eq.s32.totalorder %s10, 0
    %p53 = por %p51, %p52
    %p54 = scmp.ne.s32.totalorder %s43, %s46
    %p55 = scmp.eq.s32.totalorder %s15, 5
    %p56 = por %p54, %p55
    %p57 = scmp.ne.s32.totalorder %s46, %s47
    %p58 = scmp.eq.s32.totalorder %s15, 0
    %p59 = por %p57, %p58
    %p60 = scmp.ne.s32.totalorder %s46, %s47
    %p61 = scmp.eq.s32.totalorder %s16, 5
    %p62 = por %p60, %p61
    %p64 = scmp.ne.s32.totalorder %s47, %s63
    %p65 = scmp.eq.s32.totalorder %s16, 0
    %p66 = por %p64, %p65
    %s67 = ssub.s32 %s17, %s36
    %s68 = ssub.s32 %s18, %s32
    %s69 = sor.u32 %s67, %s68
    %s70 = ssub.s32 %s19, %s28
    %s71 = sor.u32 %s69, %s70
    %p72 = scmp.eq.s32.totalorder %s71, 0
    %s74 = sadd.s32 %s73, 1
    %s75 = scalar_select %p72, %s73, %s74
    %p78 = pneg %p72
    %p79 = scmp.eq.s32.totalorder %s10, 5
    %p80 = por %p78, %p79
    %p81 = scmp.ne.s32.totalorder %s73, %s76
    %p82 = scmp.eq.s32.totalorder %s10, 0
    %p83 = por %p81, %p82
    %p84 = scmp.ne.s32.totalorder %s73, %s76
    %p85 = scmp.eq.s32.totalorder %s15, 5
    %p86 = por %p84, %p85
    %p87 = scmp.ne.s32.totalorder %s76, %s77
    %p88 = scmp.eq.s32.totalorder %s15, 0
    %p89 = por %p87, %p88
    %p90 = scmp.ne.s32.totalorder %s76, %s77
    %p91 = scmp.eq.s32.totalorder %s16, 5
    %p92 = por %p90, %p91
    %p94 = scmp.ne.s32.totalorder %s77, %s93
    %p95 = scmp.eq.s32.totalorder %s16, 0
    %p96 = por %p94, %p95
    %s97 = ssub.s32 %s17, %s36
    %s98 = ssub.s32 %s18, %s32
    %s99 = sor.u32 %s97, %s98
    %p100 = scmp.eq.s32.totalorder %s99, 0
    %s102 = sadd.s32 %s101, 1
    %s103 = scalar_select %p100, %s101, %s102
    %p106 = pneg %p100
    %p107 = scmp.eq.s32.totalorder %s10, 5
    %p108 = por %p106, %p107
    %p109 = scmp.ne.s32.totalorder %s101, %s104
    %p110 = scmp.eq.s32.totalorder %s10, 0
    %p111 = por %p109, %p110
    %p112 = scmp.ne.s32.totalorder %s101, %s104
    %p113 = scmp.eq.s32.totalorder %s15, 5
    %p114 = por %p112, %p113
    %p115 = scmp.ne.s32.totalorder %s104, %s105
    %p116 = scmp.eq.s32.totalorder %s15, 0
    %p117 = por %p115, %p116
    %p118 = scmp.ne.s32.totalorder %s104, %s105
    %p119 = scmp.eq.s32.totalorder %s16, 5
    %p120 = por %p118, %p119
    %p122 = scmp.ne.s32.totalorder %s105, %s121
    %p123 = scmp.eq.s32.totalorder %s16, 0
    %p124 = por %p122, %p123
    %s125 = ssub.s32 %s17, %s36
    %s126 = ssub.s32 %s18, %s32
    %s127 = sor.u32 %s125, %s126
    %p128 = scmp.eq.s32.totalorder %s127, 0
    %s130 = sadd.s32 %s129, 1
    %s131 = scalar_select %p128, %s129, %s130
    %p134 = pneg %p128
    %p135 = scmp.eq.s32.totalorder %s10, 5
    %p136 = por %p134, %p135
    %p137 = scmp.ne.s32.totalorder %s129, %s132
    %p138 = scmp.eq.s32.totalorder %s10, 0
    %p139 = por %p137, %p138
    %p140 = scmp.ne.s32.totalorder %s129, %s132
    %p141 = scmp.eq.s32.totalorder %s15, 5
    %p142 = por %p140, %p141
    %p143 = scmp.ne.s32.totalorder %s132, %s133
    %p144 = scmp.eq.s32.totalorder %s15, 0
    %p145 = por %p143, %p144
    %p146 = scmp.ne.s32.totalorder %s132, %s133
    %p147 = scmp.eq.s32.totalorder %s16, 5
    %p148 = por %p146, %p147
    %p150 = scmp.ne.s32.totalorder %s133, %s149
    %p151 = scmp.eq.s32.totalorder %s16, 0
    %p152 = por %p150, %p151
    %p153 = scmp.le.s32.totalorder 1, %s10
    %p154 = scmp.lt.s32.totalorder %s10, 7
    %p155 = pnand %p153, %p154
    %p156 = pneg %p155
    // Predicated region
    $region9: #{tpu_custom_call.1} parent=5 // pred_check
      _
    $region10: #{tpu_custom_call.1} parent=5 // pred_check_branch
      %158 = sbr.rel (%p155) target = $region12
    $region11: #{tpu_custom_call.1} parent=5 // pred_region
      %s159 = ssub.s32 %s10, 1
    $region12: #{tpu_custom_call.1} parent=5 // pred_fallthru
      _
    %p160 = scmp.lt.s32.totalorder %s10, 6
    // Predicated region
    $region13: #{tpu_custom_call.1} parent=5 // pred_check
      %p161 = pneg %p160
    $region14: #{tpu_custom_call.1} parent=5 // pred_check_branch
      %163 = sbr.rel (%p161) target = $region16
    $region15: #{tpu_custom_call.1} parent=5 // pred_region
      // Predicated region
      $region17: #{tpu_custom_call.1} parent=15 // pred_check
        %p164 = pneg %p53
      $region18: #{tpu_custom_call.1} parent=15 // pred_check_branch
        %166 = sbr.rel (%p164) target = $region20
      $region19: #{tpu_custom_call.1} parent=15 // pred_region
        %s167 = smul.u32 2, %s19
        %p168 = scmp.lt.s32.totalorder %s17, 2
        %s169 = scalar_select %p168, %s17, 2
        %p170 = scmp.lt.s32.totalorder %s18, 1
        %s171 = scalar_select %p170, %s18, 1
        %p172 = scmp.lt.s32.totalorder %s167, 1
        %s173 = scalar_select %p172, %s167, 1
        %s174 = smul.addr %s171, 2
        %s175 = sadd.s32 %s173, %s174
        %s176 = smul.addr %s169, 4
        %s177 = sadd.s32 %s175, %s176
        %s178 = smul.addr %s177, 8
        %s179 = scalar_lea.vmem %s0, %s178
        %s180 = smul.u32 2, %s19
      $region20: #{tpu_custom_call.1} parent=15 // pred_fallthru
        _
      // Predicated region
      $region21: #{tpu_custom_call.1} parent=15 // pred_check
        %p181 = pneg %p83
      $region22: #{tpu_custom_call.1} parent=15 // pred_check_branch
        %183 = sbr.rel (%p181) target = $region24
      $region23: #{tpu_custom_call.1} parent=15 // pred_region
        %s184 = smul.u32 2, %s19
        %p185 = scmp.lt.s32.totalorder %s17, 2
        %s186 = scalar_select %p185, %s17, 2
        %p187 = scmp.lt.s32.totalorder %s18, 1
        %s188 = scalar_select %p187, %s18, 1
        %p189 = scmp.lt.s32.totalorder %s184, 1
        %s190 = scalar_select %p189, %s184, 1
        %s191 = smul.addr %s188, 2
        %s192 = sadd.s32 %s190, %s191
        %s193 = smul.addr %s186, 4
        %s194 = sadd.s32 %s192, %s193
        %s195 = smul.addr %s194, 8
        %s196 = scalar_lea.vmem %s1, %s195
        %s197 = smul.u32 2, %s19
      $region24: #{tpu_custom_call.1} parent=15 // pred_fallthru
        _
    $region16: #{tpu_custom_call.1} parent=5 // pred_fallthru
      _
    %p198 = scmp.le.s32.totalorder 1, %s10
    %p199 = scmp.lt.s32.totalorder %s10, 7
    %p200 = pnand %p198, %p199
    %p201 = pneg %p200
    // Predicated region
    $region25: #{tpu_custom_call.1} parent=5 // pred_check
      _
    $region26: #{tpu_custom_call.1} parent=5 // pred_check_branch
      %203 = sbr.rel (%p200) target = $region28
    $region27: #{tpu_custom_call.1} parent=5 // pred_region
      %s204 = ssub.s32 %s10, 1
      %s205 = smul.u32 2, %s22
      %p206 = scmp.lt.s32.totalorder %s20, 2
      %s207 = scalar_select %p206, %s20, 2
      %p208 = scmp.lt.s32.totalorder %s21, 1
      %s209 = scalar_select %p208, %s21, 1
      %p210 = scmp.lt.s32.totalorder %s205, 1
      %s211 = scalar_select %p210, %s205, 1
      %s212 = smul.addr %s209, 2
      %s213 = sadd.s32 %s211, %s212
      %s214 = smul.addr %s207, 4
      %s215 = sadd.s32 %s213, %s214
      %s216 = smul.addr %s215, 8
      %s217 = scalar_lea.vmem %s0, %s216
      %p218 = pneg %p59
      %p219 = pneg %p56
      %s220 = smul.u32 2, %s22
      %p221 = scmp.lt.s32.totalorder %s20, 2
      %s222 = scalar_select %p221, %s20, 2
      %p223 = scmp.lt.s32.totalorder %s21, 1
      %s224 = scalar_select %p223, %s21, 1
      %p225 = scmp.lt.s32.totalorder %s220, 1
      %s226 = scalar_select %p225, %s220, 1
      %s227 = smul.addr %s224, 2
      %s228 = sadd.s32 %s226, %s227
      %s229 = smul.addr %s222, 4
      %s230 = sadd.s32 %s228, %s229
      %s231 = smul.addr %s230, 8
      %s232 = scalar_lea.vmem %s1, %s231
      %p233 = pneg %p89
      %p234 = pneg %p86
      %p235 = pneg %p117
      %p236 = pneg %p114
      %p237 = scmp.lt.s32.totalorder %s20, 2
      %s238 = scalar_select %p237, %s20, 2
      %p239 = scmp.lt.s32.totalorder %s21, 1
      %s240 = scalar_select %p239, %s21, 1
      %s241 = smul.addr %s238, 2
      %s242 = sadd.s32 %s240, %s241
      %s243 = scalar_lea.vmem %s2, %s242
      %p244 = pneg %p145
      %p245 = pneg %p142
      %p246 = scmp.lt.s32.totalorder %s20, 2
      %s247 = scalar_select %p246, %s20, 2
      %p248 = scmp.lt.s32.totalorder %s21, 1
      %s249 = scalar_select %p248, %s21, 1
      %s250 = smul.addr %s247, 2
      %s251 = sadd.s32 %s249, %s250
      %s252 = scalar_lea.vmem %s3, %s251
      %s253 = smul.u32 2, %s22
      %p254 = scmp.lt.s32.totalorder %s20, 2
      %s255 = scalar_select %p254, %s20, 2
      %p256 = scmp.lt.s32.totalorder %s21, 1
      %s257 = scalar_select %p256, %s21, 1
      %p258 = scmp.lt.s32.totalorder %s253, 1
      %s259 = scalar_select %p258, %s253, 1
      %s260 = smul.addr %s257, 2
      %s261 = sadd.s32 %s259, %s260
      %s262 = smul.addr %s255, 4
      %s263 = sadd.s32 %s261, %s262
      %s264 = smul.addr %s263, 8
      %s265 = scalar_lea.vmem %s0, %s264
      %s266 = smul.u32 2, %s22
      %s267 = smul.u32 2, %s22
      %p268 = scmp.lt.s32.totalorder %s20, 2
      %s269 = scalar_select %p268, %s20, 2
      %p270 = scmp.lt.s32.totalorder %s21, 1
      %s271 = scalar_select %p270, %s21, 1
      %p272 = scmp.lt.s32.totalorder %s267, 1
      %s273 = scalar_select %p272, %s267, 1
      %s274 = smul.addr %s271, 2
      %s275 = sadd.s32 %s273, %s274
      %s276 = smul.addr %s269, 4
      %s277 = sadd.s32 %s275, %s276
      %s278 = smul.addr %s277, 8
      %s279 = scalar_lea.vmem %s1, %s278
      %s280 = smul.u32 2, %s22
      %p281 = scmp.lt.s32.totalorder %s20, 2
      %s282 = scalar_select %p281, %s20, 2
      %p283 = scmp.lt.s32.totalorder %s21, 1
      %s284 = scalar_select %p283, %s21, 1
      %s285 = smul.addr %s282, 2
      %s286 = sadd.s32 %s284, %s285
      %s287 = scalar_lea.vmem %s2, %s286
      %p288 = scmp.lt.s32.totalorder %s20, 2
      %s289 = scalar_select %p288, %s20, 2
      %p290 = scmp.lt.s32.totalorder %s21, 1
      %s291 = scalar_select %p290, %s21, 1
      %s292 = smul.addr %s289, 2
      %s293 = sadd.s32 %s291, %s292
      %s294 = scalar_lea.vmem %s3, %s293
      %v295 = vld [vmem:[%s265] sm:$0xff]
      %v296 = vld [vmem:[%s265 + $0x8] sm:$0xff]
      %v297 = vld [vmem:[%s279] sm:$0xff]
      %v298 = vld [vmem:[%s279 + $0x8] sm:$0xff]
      %v299 = vlaneseq
      %v300 = vand.u32 %v299, 127
      %301 = vset.pattern.permute.xlu0 0
      %302 = vperm.xlu0 %301, %v297
      %v303 = vpop.permute.xlu0 %302
      %304 = vset.pattern.permute.xlu0 0
      %305 = vperm.xlu0 %304, %v298
      %v306 = vpop.permute.xlu0 %305
      %vm307 = vcmp.eq.s32.totalorder %v300, %v303
      %vm308 = vcmp.eq.s32.totalorder %v300, %v306
      %v309 = vsel %vm307, 1, 0
      %v310 = vsel %vm308, 1, 0
      %v311 = vcvt.s32.f32 %v309
      %v312 = vcvt.s32.f32 %v310
      %v313 = vand.u32 2147483647, %v295
      %v314 = vand.u32 2147483647, %v296
      %v315 = vsub.f32 0.0, %v313
      %v316 = vsub.f32 0.0, %v314
      %v317 = vmul.f32 %v315, 1.442695
      %v318 = vpow.pop %v317
      %v319 = vmul.f32 %v316, 1.442695
      %v320 = vpow.pop %v319
      %v321 = vadd.f32 %v318, 1.0
      %v322 = vadd.f32 %v320, 1.0
      %v323 = vrcp.pop %v321
      %v324 = vrcp.pop %v322
      %vm325 = vcmp.ge.f32.partialorder %v295, 0.0
      %vm326 = vcmp.ge.f32.partialorder %v296, 0.0
      %v327 = vmul.f32 %v318, %v323
      %v328 = vmul.f32 %v320, %v324
      %v329 = vsel %vm325, %v323, %v327
      %v330 = vsel %vm326, %v324, %v328
      %v331 = vmax.f32 %v295, 0.0
      %v332 = vmax.f32 %v296, 0.0
      %v333 = vmul.f32 %v295, %v311
      %v334 = vmul.f32 %v296, %v312
      %v335 = vsub.f32 %v331, %v333
      %v336 = vsub.f32 %v332, %v334
      %v337 = vlog2.pop %v321
      %v338 = vmul.f32 %v337, 0.6931472
      %v339 = vlog2.pop %v322
      %v340 = vmul.f32 %v339, 0.6931472
      %v341 = vadd.f32 %v335, %v338
      %v342 = vadd.f32 %v336, %v340
      %v343 = vmul.f32 %v329, %v311
      %v344 = vmul.f32 %v330, %v312
      %v345 = vsub.f32 1.0, %v329
      %v346 = vsub.f32 1.0, %v330
      %v347 = vsub.f32 1.0, %v311
      %v348 = vsub.f32 1.0, %v312
      %v349 = vmul.f32 %v345, %v347
      %v350 = vmul.f32 %v346, %v348
      %v351 = vadd.f32 %v343, %v349
      %v352 = vadd.f32 %v344, %v350
      %v353 = vsub.f32 1.0, %v351
      %v354 = vsub.f32 1.0, %v352
      %v355 = vmul.f32 %v353, %v353
      %v356 = vmul.f32 %v354, %v354
      %v357 = vmul.f32 %v311, 0.25
      %v358 = vmul.f32 %v312, 0.25
      %v359 = vmul.f32 %v347, 0.75
      %v360 = vmul.f32 %v348, 0.75
      %v361 = vadd.f32 %v357, %v359
      %v362 = vadd.f32 %v358, %v360
      %v363 = vmul.f32 %v361, %v355
      %v364 = vmul.f32 %v362, %v356
      %v365 = vmul.f32 %v363, %v341
      %v366 = vmul.f32 %v364, %v342
      %vm367 = vcmask 64512
      %v368 = vsel %vm367, %v365, 0.0
      %v369 = vsel %vm367, %v366, 0.0
      %v370 = vadd.f32 %v368, %v369
      %371 = vadd.xlane.f32.xlu0 %v370
      %v372 = vpop.xlane.xlu0 %371
      %v373 = vrot.slane %v372, 4
      %v374 = vadd.f32 %v372, %v373
      %v375 = vrot.slane %v374, 2
      %v376 = vadd.f32 %v374, %v375
      %v377 = vrot.slane %v376, 1
      %v378 = vadd.f32 %v376, %v377
      %s379 = vtos %v378
      %vm380 = vcmp.eq.s32.totalorder %v300, 7
      %v381 = vsel %vm380, %v295, 0.0
      %v382 = vsel %vm380, %v296, 0.0
      %v383 = vsel %vm367, %v381, 0.0
      %384 = vadd.xlane.f32.xlu0 %v383
      %v385 = vpop.xlane.xlu0 %384
      %v386 = vsel %vm367, %v382, 0.0
      %387 = vadd.xlane.f32.xlu0 %v386
      %v388 = vpop.xlane.xlu0 %387
      %v389 = vsel %vm380, -inf, %v295
      %v390 = vsel %vm380, -inf, %v296
      %v391 = vsel %vm367, %v389, -inf
      %392 = vmax.xlane.f32.xlu0 %v391
      %v393 = vpop.xlane.xlu0 %392
      %v394 = vsel %vm367, %v390, -inf
      %395 = vmax.xlane.f32.xlu0 %v394
      %v396 = vpop.xlane.xlu0 %395
      %vm397 = vcmp.ge.f32.partialorder %v393, %v385
      %vm398 = vcmp.ge.f32.partialorder %v396, %v388
      %v399 = vsel %vm397, 1, 0
      %v400 = vsel %vm398, 1, 0
      %v401 = vcvt.s32.f32 %v399
      %v402 = vcvt.s32.f32 %v400
      %vm403 = vcmask 7168
      %v404 = vsel %vm403, %v401, 0.0
      %v405 = vsel %vm403, %v402, 0.0
      %v406 = vadd.f32 %v404, %v405
      %407 = vadd.xlane.f32.xlu0 %v406
      %v408 = vpop.xlane.xlu0 %407
      %v409 = vrot.slane %v408, 4
      %v410 = vadd.f32 %v408, %v409
      %v411 = vrot.slane %v410, 2
      %v412 = vadd.f32 %v410, %v411
      %v413 = vrot.slane %v412, 1
      %v414 = vadd.f32 %v412, %v413
      %s415 = vtos %v414
      %p416 = scmp.eq.s32.totalorder %s22, 0
      // Predicated region
      $region29: #{tpu_custom_call.1} parent=27 // pred_check
        %p417 = pneg %p416
      $region30: #{tpu_custom_call.1} parent=27 // pred_check_branch
        %419 = sbr.rel (%p417) target = $region32
      $region31: #{tpu_custom_call.1} parent=27 // pred_region
        %vm420 = vcmask 0
        %421 = vst.msk [vmem:[%s287] sm:$0x1] %vm420, 0.0
        %422 = vst.msk [vmem:[%s294] sm:$0x1] %vm420, 0.0
      $region32: #{tpu_custom_call.1} parent=27 // pred_fallthru
        _
      %v423 = vld [vmem:[%s287] sm:$0x1]
      %v424 = vstv %s379
      %v425 = vadd.f32 %v423, %v424
      %vm426 = vcmask 0
      %427 = vst.msk [vmem:[%s287] sm:$0x1] %vm426, %v425
      %v428 = vld [vmem:[%s294] sm:$0x1]
      %v429 = vstv %s415
      %v430 = vadd.f32 %v428, %v429
      %431 = vst.msk [vmem:[%s294] sm:$0x1] %vm426, %v430
      %p432 = scmp.lt.s32.totalorder %s20, 2
      %s433 = scalar_select %p432, %s20, 2
      %p434 = scmp.lt.s32.totalorder %s21, 1
      %s435 = scalar_select %p434, %s21, 1
      %s436 = smul.addr %s433, 2
      %s437 = sadd.s32 %s435, %s436
      %s438 = scalar_lea.vmem %s2, %s437
      %p439 = scmp.lt.s32.totalorder %s20, 2
      %s440 = scalar_select %p439, %s20, 2
      %p441 = scmp.lt.s32.totalorder %s21, 1
      %s442 = scalar_select %p441, %s21, 1
      %s443 = smul.addr %s440, 2
      %s444 = sadd.s32 %s442, %s443
      %s445 = scalar_lea.vmem %s3, %s444
      // Predicated region
      $region33: #{tpu_custom_call.1} parent=27 // pred_check
        %p446 = pneg %p114
      $region34: #{tpu_custom_call.1} parent=27 // pred_check_branch
        %448 = sbr.rel (%p446) target = $region36
      $region35: #{tpu_custom_call.1} parent=27 // pred_region
        _
      $region36: #{tpu_custom_call.1} parent=27 // pred_fallthru
        _
      // Predicated region
      $region37: #{tpu_custom_call.1} parent=27 // pred_check
        %p449 = pneg %p142
      $region38: #{tpu_custom_call.1} parent=27 // pred_check_branch
        %451 = sbr.rel (%p449) target = $region40
      $region39: #{tpu_custom_call.1} parent=27 // pred_region
        _
      $region40: #{tpu_custom_call.1} parent=27 // pred_fallthru
        _
    $region28: #{tpu_custom_call.1} parent=5 // pred_fallthru
      _
    %p452 = scmp.le.s32.totalorder 2, %s10
    // Predicated region
    $region41: #{tpu_custom_call.1} parent=5 // pred_check
      %p453 = pneg %p452
    $region42: #{tpu_custom_call.1} parent=5 // pred_check_branch
      %455 = sbr.rel (%p453) target = $region44
    $region43: #{tpu_custom_call.1} parent=5 // pred_region
      %s456 = ssub.s32 %s10, 2
      // Predicated region
      $region45: #{tpu_custom_call.1} parent=43 // pred_check
        %p457 = pneg %p120
      $region46: #{tpu_custom_call.1} parent=43 // pred_check_branch
        %459 = sbr.rel (%p457) target = $region48
      $region47: #{tpu_custom_call.1} parent=43 // pred_region
        %p460 = scmp.lt.s32.totalorder %s23, 2
        %s461 = scalar_select %p460, %s23, 2
        %p462 = scmp.lt.s32.totalorder %s24, 1
        %s463 = scalar_select %p462, %s24, 1
        %s464 = smul.addr %s461, 2
        %s465 = sadd.s32 %s463, %s464
        %s466 = scalar_lea.vmem %s2, %s465
      $region48: #{tpu_custom_call.1} parent=43 // pred_fallthru
        _
      // Predicated region
      $region49: #{tpu_custom_call.1} parent=43 // pred_check
        %p467 = pneg %p148
      $region50: #{tpu_custom_call.1} parent=43 // pred_check_branch
        %469 = sbr.rel (%p467) target = $region52
      $region51: #{tpu_custom_call.1} parent=43 // pred_region
        %p470 = scmp.lt.s32.totalorder %s23, 2
        %s471 = scalar_select %p470, %s23, 2
        %p472 = scmp.lt.s32.totalorder %s24, 1
        %s473 = scalar_select %p472, %s24, 1
        %s474 = smul.addr %s471, 2
        %s475 = sadd.s32 %s473, %s474
        %s476 = scalar_lea.vmem %s3, %s475
      $region52: #{tpu_custom_call.1} parent=43 // pred_fallthru
        _
    $region44: #{tpu_custom_call.1} parent=5 // pred_fallthru
      _
  $region6: #{tpu_custom_call.1} parent=0 // loop_footer
    %s14 = sadd.s32 1, %s10
  $region7: #{tpu_custom_call.1} parent=0 // loop_footer_branch
    %9 = sbr.rel target = $region3
  $region8: #{tpu_custom_call.1} parent=0 // loop_exit
    _

</llo_original>
